<compile_context>
chip_gen: v7x
topology: tpu7x:2x2x1
jax: 0.10.0
libtpu: 0.0.40
codegen_flags: <defaults>
</compile_context>

<pallas_src>
import functools

import jax
import jax.numpy as jnp
from jax.experimental import pallas as pl
from jax.experimental.pallas import tpu as pltpu

H1, H2, H3, OUT = 128, 256, 512, 2


def _mlp_kernel(x_ref, w1_ref, b1_ref, w2_ref, b2_ref, w3_ref, b3_ref,
                w4_ref, b4_ref, out_ref):
    f32 = jnp.float32
    cdt = w1_ref.dtype  # bf16 compute dtype for the MXU (set by the wrapper)

    # Feed the MXU in the narrow dtype; accumulate in f32.
    x = x_ref[...].astype(cdt)                                    # (tn, d_in)

    h = jnp.dot(x, w1_ref[...], preferred_element_type=f32)
    h = jnp.maximum(h + b1_ref[...].astype(f32), 0.0).astype(cdt)  # (tn, 128)

    h = jnp.dot(h, w2_ref[...], preferred_element_type=f32)
    h = jnp.maximum(h + b2_ref[...].astype(f32), 0.0).astype(cdt)  # (tn, 256)

    h = jnp.dot(h, w3_ref[...], preferred_element_type=f32)
    h = jnp.maximum(h + b3_ref[...].astype(f32), 0.0).astype(cdt)  # (tn, 512)

    z = jnp.dot(h, w4_ref[...], preferred_element_type=f32)
    z = z + b4_ref[...].astype(f32)                                # (tn, 2) f32

    # Closed-form 2-class softmax: p1 = sigmoid(z1 - z0), p0 = 1 - p1.
    # (No cross-lane max/sum reductions on a 126/128-padding vreg; single exp.)
    z0 = z[:, 0:1]
    z1 = z[:, 1:2]
    p1 = pl.reciprocal(1.0 + jnp.exp(z0 - z1), approx=True)        # (tn, 1)
    p0 = 1.0 - p1

    # Single fused (tn, 4) output block: [logits | prob].
    out_ref[:, 0:2] = z.astype(out_ref.dtype)
    out_ref[:, 2:3] = p0.astype(out_ref.dtype)
    out_ref[:, 3:4] = p1.astype(out_ref.dtype)


def _pick_tile(n, tile_n):
    """Batch-tile size: multiple of 8 (or the full batch), and >= 2 grid steps
    for large batches so both v7x TensorCores get work on the parallel axis."""
    tile_n = max(8, (tile_n // 8) * 8)
    if n <= tile_n:
        if n >= 1024:
            return (((n + 1) // 2) + 7) // 8 * 8   # split large batch in two
        return n                                   # full-extent block is legal
    return tile_n


@functools.partial(jax.jit, static_argnames=("tile_n",))
def mlp_forward(x, w1, b1, w2, b2, w3, b3, w4, b4, *, tile_n=1024):
    """x: (N, input_size). Weights stored as (in, out); biases (out,) or (1, out).
    Returns (logits, prob), each (N, 2) in float32, matching the PyTorch forward."""
    N, d_in = x.shape
    cdt = jnp.bfloat16

    # One-time wrapper cast: bf16 weights/biases for the resident VMEM copies
    # and the bf16 MXU path.  (x is cast in-kernel to avoid an extra HBM copy.)
    w1, w2, w3, w4 = (w.astype(cdt) for w in (w1, w2, w3, w4))
    b1, b2, b3, b4 = (b.reshape(1, -1).astype(cdt) for b in (b1, b2, b3, b4))

    tn = _pick_tile(N, tile_n)
    grid = (pl.cdiv(N, tn),)

    row_spec = lambda shape: pl.BlockSpec(shape, lambda i: (i, 0))
    const_spec = lambda shape: pl.BlockSpec(shape, lambda i: (0, 0))

    fused = pl.pallas_call(
        _mlp_kernel,
        out_shape=jax.ShapeDtypeStruct((N, 2 * OUT), jnp.float32),
        grid=grid,
        in_specs=[
            row_spec((tn, d_in)),        # x tile: streamed / double-buffered
            const_spec((d_in, H1)),      # weights/biases: constant index_map ->
            const_spec((1, H1)),         #   fetched once, VMEM-resident
            const_spec((H1, H2)),
            const_spec((1, H2)),
            const_spec((H2, H3)),
            const_spec((1, H3)),
            const_spec((H3, OUT)),
            const_spec((1, OUT)),
        ],
        out_specs=row_spec((tn, 2 * OUT)),   # [logits | prob] fused block
        compiler_params=pltpu.CompilerParams(
            dimension_semantics=("parallel",),
            vmem_limit_bytes=48 * 1024 * 1024,
        ),
    )(x, w1, b1, w2, b2, w3, b3, w4, b4)

    logits = fused[:, :OUT]
    prob = fused[:, OUT:]
    return logits, prob


def _ref_forward(x, w1, b1, w2, b2, w3, b3, w4, b4):
    h = jax.nn.relu(x @ w1 + b1)
    h = jax.nn.relu(h @ w2 + b2)
    h = jax.nn.relu(h @ w3 + b3)
    z = h @ w4 + b4
    return z, jax.nn.softmax(z, axis=1)


if __name__ == "__main__":
    key = jax.random.PRNGKey(0)
    keys = jax.random.split(key, 10)

    N = 8            # small batch for the demo
    INPUT_SIZE = 32  # module's `input_size`

    def init_linear(kw, kb, fan_in, fan_out):
        # PyTorch-like uniform init; exact init does not matter for the check.
        lim = 1.0 / jnp.sqrt(fan_in)
        w = jax.random.uniform(kw, (fan_in, fan_out), jnp.float32, -lim, lim)
        b = jax.random.uniform(kb, (1, fan_out), jnp.float32, -lim, lim)
        return w, b

    x = jax.random.normal(keys[0], (N, INPUT_SIZE), dtype=jnp.float32)
    w1, b1 = init_linear(keys[1], keys[2], INPUT_SIZE, H1)
    w2, b2 = init_linear(keys[3], keys[4], H1, H2)
    w3, b3 = init_linear(keys[5], keys[6], H2, H3)
    w4, b4 = init_linear(keys[7], keys[8], H3, OUT)

    logits, prob = mlp_forward(x, w1, b1, w2, b2, w3, b3, w4, b4)
    logits, prob = jax.block_until_ready((logits, prob))

    # Pure-JAX f32 reference: loose tolerance accounts for the bf16 MXU path.
    logits_ref, prob_ref = _ref_forward(x, w1, b1, w2, b2, w3, b3, w4, b4)
    assert jnp.allclose(logits, logits_ref, rtol=5e-2, atol=5e-2), (
        logits, logits_ref)
    assert jnp.allclose(prob, prob_ref, rtol=5e-2, atol=5e-2), (prob, prob_ref)

    # Internal-consistency check: kernel prob ~= softmax(kernel logits)
    # (only the closed-form + approximate-reciprocal error remains).
    prob_from_logits = jax.nn.softmax(logits, axis=1)
    assert jnp.allclose(prob, prob_from_logits, atol=2e-3), (
        prob, prob_from_logits)

    print("KERNEL_OK")
</pallas_src>

<mosaic_0001>
module attributes {stable_mosaic.version = 11 : i64} {
  func.func @_mlp_kernel(%arg0: i32, %arg1: memref<8x32xf32, #tpu.memory_space<vmem>>, %arg2: memref<32x128xbf16, #tpu.memory_space<vmem>>, %arg3: memref<1x128xbf16, #tpu.memory_space<vmem>>, %arg4: memref<128x256xbf16, #tpu.memory_space<vmem>>, %arg5: memref<1x256xbf16, #tpu.memory_space<vmem>>, %arg6: memref<256x512xbf16, #tpu.memory_space<vmem>>, %arg7: memref<1x512xbf16, #tpu.memory_space<vmem>>, %arg8: memref<512x2xbf16, #tpu.memory_space<vmem>>, %arg9: memref<1x2xbf16, #tpu.memory_space<vmem>>, %arg10: memref<8x4xf32, #tpu.memory_space<vmem>>) attributes {dimension_semantics = [#tpu.dimension_semantics<parallel>], iteration_bounds = array<i64: 1>, scalar_prefetch = 0 : i64, scratch_operands = 0 : i64, tpu.core_type = #tpu.core_type<tc>, window_params = [{transform_indices = @transform_0, window_bounds = array<i64: 8, 32>}, {pipeline_mode = #tpu.pipeline_mode<synchronous>, transform_indices = @transform_1, window_bounds = array<i64: 32, 128>}, {pipeline_mode = #tpu.pipeline_mode<synchronous>, transform_indices = @transform_2, window_bounds = array<i64: 1, 128>}, {pipeline_mode = #tpu.pipeline_mode<synchronous>, transform_indices = @transform_3, window_bounds = array<i64: 128, 256>}, {pipeline_mode = #tpu.pipeline_mode<synchronous>, transform_indices = @transform_4, window_bounds = array<i64: 1, 256>}, {pipeline_mode = #tpu.pipeline_mode<synchronous>, transform_indices = @transform_5, window_bounds = array<i64: 256, 512>}, {pipeline_mode = #tpu.pipeline_mode<synchronous>, transform_indices = @transform_6, window_bounds = array<i64: 1, 512>}, {pipeline_mode = #tpu.pipeline_mode<synchronous>, transform_indices = @transform_7, window_bounds = array<i64: 512, 2>}, {pipeline_mode = #tpu.pipeline_mode<synchronous>, transform_indices = @transform_8, window_bounds = array<i64: 1, 2>}, {transform_indices = @transform_9, window_bounds = array<i64: 8, 4>}]} {
    %c0 = arith.constant 0 : index
    %c0_0 = arith.constant 0 : index
    %0 = vector.load %arg1[%c0, %c0_0] : memref<8x32xf32, #tpu.memory_space<vmem>>, vector<8x32xf32>
    %1 = arith.truncf %0 : vector<8x32xf32> to vector<8x32xbf16>
    %c0_1 = arith.constant 0 : index
    %c0_2 = arith.constant 0 : index
    %2 = vector.load %arg2[%c0_1, %c0_2] : memref<32x128xbf16, #tpu.memory_space<vmem>>, vector<32x128xbf16>
    %cst = arith.constant dense<0.000000e+00> : vector<8x128xf32>
    %3 = tpu.matmul %1, %2, %cst {dimension_numbers = #tpu.dot_dimension_numbers<[1], [0], [0], [1], [0, 0, 1, 1], [], []>} : vector<8x32xbf16>, vector<32x128xbf16>, vector<8x128xf32> -> vector<8x128xf32>
    %c0_3 = arith.constant 0 : index
    %c0_4 = arith.constant 0 : index
    %4 = vector.load %arg3[%c0_3, %c0_4] : memref<1x128xbf16, #tpu.memory_space<vmem>>, vector<1x128xbf16>
    %5 = arith.extf %4 : vector<1x128xbf16> to vector<1x128xf32>
    %6 = vector.broadcast %5 : vector<1x128xf32> to vector<8x128xf32>
    %7 = arith.addf %3, %6 : vector<8x128xf32>
    %cst_5 = arith.constant 0.000000e+00 : f32
    %8 = vector.broadcast %cst_5 : f32 to vector<8x128xf32>
    %9 = arith.maximumf %7, %8 : vector<8x128xf32>
    %10 = arith.truncf %9 : vector<8x128xf32> to vector<8x128xbf16>
    %c0_6 = arith.constant 0 : index
    %c0_7 = arith.constant 0 : index
    %11 = vector.load %arg4[%c0_6, %c0_7] : memref<128x256xbf16, #tpu.memory_space<vmem>>, vector<128x256xbf16>
    %cst_8 = arith.constant dense<0.000000e+00> : vector<8x256xf32>
    %12 = tpu.matmul %10, %11, %cst_8 {dimension_numbers = #tpu.dot_dimension_numbers<[1], [0], [0], [1], [0, 0, 1, 1], [], []>} : vector<8x128xbf16>, vector<128x256xbf16>, vector<8x256xf32> -> vector<8x256xf32>
    %c0_9 = arith.constant 0 : index
    %c0_10 = arith.constant 0 : index
    %13 = vector.load %arg5[%c0_9, %c0_10] : memref<1x256xbf16, #tpu.memory_space<vmem>>, vector<1x256xbf16>
    %14 = arith.extf %13 : vector<1x256xbf16> to vector<1x256xf32>
    %15 = vector.broadcast %14 : vector<1x256xf32> to vector<8x256xf32>
    %16 = arith.addf %12, %15 : vector<8x256xf32>
    %cst_11 = arith.constant 0.000000e+00 : f32
    %17 = vector.broadcast %cst_11 : f32 to vector<8x256xf32>
    %18 = arith.maximumf %16, %17 : vector<8x256xf32>
    %19 = arith.truncf %18 : vector<8x256xf32> to vector<8x256xbf16>
    %c0_12 = arith.constant 0 : index
    %c0_13 = arith.constant 0 : index
    %20 = vector.load %arg6[%c0_12, %c0_13] : memref<256x512xbf16, #tpu.memory_space<vmem>>, vector<256x512xbf16>
    %cst_14 = arith.constant dense<0.000000e+00> : vector<8x512xf32>
    %21 = tpu.matmul %19, %20, %cst_14 {dimension_numbers = #tpu.dot_dimension_numbers<[1], [0], [0], [1], [0, 0, 1, 1], [], []>} : vector<8x256xbf16>, vector<256x512xbf16>, vector<8x512xf32> -> vector<8x512xf32>
    %c0_15 = arith.constant 0 : index
    %c0_16 = arith.constant 0 : index
    %22 = vector.load %arg7[%c0_15, %c0_16] : memref<1x512xbf16, #tpu.memory_space<vmem>>, vector<1x512xbf16>
    %23 = arith.extf %22 : vector<1x512xbf16> to vector<1x512xf32>
    %24 = vector.broadcast %23 : vector<1x512xf32> to vector<8x512xf32>
    %25 = arith.addf %21, %24 : vector<8x512xf32>
    %cst_17 = arith.constant 0.000000e+00 : f32
    %26 = vector.broadcast %cst_17 : f32 to vector<8x512xf32>
    %27 = arith.maximumf %25, %26 : vector<8x512xf32>
    %28 = arith.truncf %27 : vector<8x512xf32> to vector<8x512xbf16>
    %c0_18 = arith.constant 0 : index
    %c0_19 = arith.constant 0 : index
    %29 = vector.load %arg8[%c0_18, %c0_19] : memref<512x2xbf16, #tpu.memory_space<vmem>>, vector<512x2xbf16>
    %cst_20 = arith.constant dense<0.000000e+00> : vector<8x2xf32>
    %30 = tpu.matmul %28, %29, %cst_20 {dimension_numbers = #tpu.dot_dimension_numbers<[1], [0], [0], [1], [0, 0, 1, 1], [], []>} : vector<8x512xbf16>, vector<512x2xbf16>, vector<8x2xf32> -> vector<8x2xf32>
    %c0_21 = arith.constant 0 : index
    %c0_22 = arith.constant 0 : index
    %31 = vector.load %arg9[%c0_21, %c0_22] : memref<1x2xbf16, #tpu.memory_space<vmem>>, vector<1x2xbf16>
    %32 = arith.extf %31 : vector<1x2xbf16> to vector<1x2xf32>
    %33 = vector.broadcast %32 : vector<1x2xf32> to vector<8x2xf32>
    %34 = arith.addf %30, %33 : vector<8x2xf32>
    %35 = vector.extract_strided_slice %34 {offsets = [0, 0], sizes = [8, 1], strides = [1, 1]} : vector<8x2xf32> to vector<8x1xf32>
    %36 = vector.extract_strided_slice %34 {offsets = [0, 1], sizes = [8, 1], strides = [1, 1]} : vector<8x2xf32> to vector<8x1xf32>
    %37 = arith.subf %35, %36 : vector<8x1xf32>
    %38 = math.exp %37 : vector<8x1xf32>
    %cst_23 = arith.constant 1.000000e+00 : f32
    %39 = vector.broadcast %cst_23 : f32 to vector<8x1xf32>
    %40 = arith.addf %39, %38 : vector<8x1xf32>
    %41 = tpu.reciprocal %40 {approx = true} : vector<8x1xf32> -> vector<8x1xf32>
    %cst_24 = arith.constant 1.000000e+00 : f32
    %42 = vector.broadcast %cst_24 : f32 to vector<8x1xf32>
    %43 = arith.subf %42, %41 : vector<8x1xf32>
    %c0_25 = arith.constant 0 : index
    %c0_26 = arith.constant 0 : index
    %44 = vector.load %arg10[%c0_25, %c0_26] : memref<8x4xf32, #tpu.memory_space<vmem>>, vector<8x2xf32>
    tpu.vector_store %arg10[%c0_25, %c0_26], %34 {strides = array<i32>} : memref<8x4xf32, #tpu.memory_space<vmem>>, vector<8x2xf32>,
    %c0_27 = arith.constant 0 : index
    %c2 = arith.constant 2 : index
    %45 = vector.load %arg10[%c0_27, %c2] : memref<8x4xf32, #tpu.memory_space<vmem>>, vector<8x1xf32>
    tpu.vector_store %arg10[%c0_27, %c2], %43 {strides = array<i32>} : memref<8x4xf32, #tpu.memory_space<vmem>>, vector<8x1xf32>,
    %c0_28 = arith.constant 0 : index
    %c3 = arith.constant 3 : index
    %46 = vector.load %arg10[%c0_28, %c3] : memref<8x4xf32, #tpu.memory_space<vmem>>, vector<8x1xf32>
    tpu.vector_store %arg10[%c0_28, %c3], %41 {strides = array<i32>} : memref<8x4xf32, #tpu.memory_space<vmem>>, vector<8x1xf32>,
    return
  }
  func.func @transform_0(%arg0: i32) -> (i32, i32) {
    %c0_i32 = arith.constant 0 : i32
    %c0_i32_0 = arith.constant 0 : i32
    return %arg0, %c0_i32 : i32, i32
  }
  func.func @transform_1(%arg0: i32) -> (i32, i32) {
    %c0_i32 = arith.constant 0 : i32
    %c0_i32_0 = arith.constant 0 : i32
    %c0_i32_1 = arith.constant 0 : i32
    return %c0_i32, %c0_i32_0 : i32, i32
  }
  func.func @transform_2(%arg0: i32) -> (i32, i32) {
    %c0_i32 = arith.constant 0 : i32
    %c0_i32_0 = arith.constant 0 : i32
    %c0_i32_1 = arith.constant 0 : i32
    return %c0_i32, %c0_i32_0 : i32, i32
  }
  func.func @transform_3(%arg0: i32) -> (i32, i32) {
    %c0_i32 = arith.constant 0 : i32
    %c0_i32_0 = arith.constant 0 : i32
    %c0_i32_1 = arith.constant 0 : i32
    return %c0_i32, %c0_i32_0 : i32, i32
  }
  func.func @transform_4(%arg0: i32) -> (i32, i32) {
    %c0_i32 = arith.constant 0 : i32
    %c0_i32_0 = arith.constant 0 : i32
    %c0_i32_1 = arith.constant 0 : i32
    return %c0_i32, %c0_i32_0 : i32, i32
  }
  func.func @transform_5(%arg0: i32) -> (i32, i32) {
    %c0_i32 = arith.constant 0 : i32
    %c0_i32_0 = arith.constant 0 : i32
    %c0_i32_1 = arith.constant 0 : i32
    return %c0_i32, %c0_i32_0 : i32, i32
  }
  func.func @transform_6(%arg0: i32) -> (i32, i32) {
    %c0_i32 = arith.constant 0 : i32
    %c0_i32_0 = arith.constant 0 : i32
    %c0_i32_1 = arith.constant 0 : i32
    return %c0_i32, %c0_i32_0 : i32, i32
  }
  func.func @transform_7(%arg0: i32) -> (i32, i32) {
    %c0_i32 = arith.constant 0 : i32
    %c0_i32_0 = arith.constant 0 : i32
    %c0_i32_1 = arith.constant 0 : i32
    return %c0_i32, %c0_i32_0 : i32, i32
  }
  func.func @transform_8(%arg0: i32) -> (i32, i32) {
    %c0_i32 = arith.constant 0 : i32
    %c0_i32_0 = arith.constant 0 : i32
    %c0_i32_1 = arith.constant 0 : i32
    return %c0_i32, %c0_i32_0 : i32, i32
  }
  func.func @transform_9(%arg0: i32) -> (i32, i32) {
    %c0_i32 = arith.constant 0 : i32
    %c0_i32_0 = arith.constant 0 : i32
    return %arg0, %c0_i32 : i32, i32
  }
}

</mosaic_0001>

<llo_original>
// kernel: mlp_forward.1
$region0: #{mlp_forward.1}
  #allocation0 [shape = 'u32[]', space=smem, size = 0x4, offset = 0x4, fixed_abs, tag = 'smem constant byte address 0x4 - core index']
  #allocation1 [shape = 'u32[144,128]{1,0:T(1,128)}', space=vmem, size = 0x12000, scoped, tag = 'internal scratch']
  %s0 = inlined_call_operand.vmem [shape: f32[8,32], index: 0, kind: input, shape index: {}]
  %s1 = inlined_call_operand.vmem [shape: bf16[32,128], index: 1, kind: input, shape index: {}]
  %s2 = inlined_call_operand.vmem [shape: bf16[1,128], index: 2, kind: input, shape index: {}]
  %s3 = inlined_call_operand.vmem [shape: bf16[128,256], index: 3, kind: input, shape index: {}]
  %s4 = inlined_call_operand.vmem [shape: bf16[1,256], index: 4, kind: input, shape index: {}]
  %s5 = inlined_call_operand.vmem [shape: bf16[256,512], index: 5, kind: input, shape index: {}]
  %s6 = inlined_call_operand.vmem [shape: bf16[1,512], index: 6, kind: input, shape index: {}]
  %s7 = inlined_call_operand.vmem [shape: bf16[512,2], index: 7, kind: input, shape index: {}]
  %s8 = inlined_call_operand.vmem [shape: bf16[1,2], index: 8, kind: input, shape index: {}]
  %s9 = inlined_call_operand.vmem [shape: f32[8,4], index: 9, kind: output, shape index: {}]
  %s10 = sld [smem:[#allocation0]]
  $region46: #{mlp_forward.1} parent=0
    _
  %s12 = ssub.s32 1, %s10
  %s13 = scalar_select 0, %s12, %s10
  // Predicated region
  $region2: #{mlp_forward.1} parent=0 // pred_check
    _
  $region3: #{mlp_forward.1} parent=0 // pred_check_branch
    %15 = sbr.rel (0) target = $region5
  $region4: #{mlp_forward.1} parent=0 // pred_region
    _
  $region5: #{mlp_forward.1} parent=0 // pred_fallthru
    _
  // Predicated region
  $region6: #{mlp_forward.1} parent=0 // pred_check
    _
  $region7: #{mlp_forward.1} parent=0 // pred_check_branch
    %17 = sbr.rel (0) target = $region9
  $region8: #{mlp_forward.1} parent=0 // pred_region
    _
  $region9: #{mlp_forward.1} parent=0 // pred_fallthru
    _
  // Predicated region
  $region10: #{mlp_forward.1} parent=0 // pred_check
    _
  $region11: #{mlp_forward.1} parent=0 // pred_check_branch
    %19 = sbr.rel (0) target = $region13
  $region12: #{mlp_forward.1} parent=0 // pred_region
    _
  $region13: #{mlp_forward.1} parent=0 // pred_fallthru
    _
  // Predicated region
  $region14: #{mlp_forward.1} parent=0 // pred_check
    _
  $region15: #{mlp_forward.1} parent=0 // pred_check_branch
    %21 = sbr.rel (0) target = $region17
  $region16: #{mlp_forward.1} parent=0 // pred_region
    _
  $region17: #{mlp_forward.1} parent=0 // pred_fallthru
    _
  // Predicated region
  $region18: #{mlp_forward.1} parent=0 // pred_check
    _
  $region19: #{mlp_forward.1} parent=0 // pred_check_branch
    %23 = sbr.rel (0) target = $region21
  $region20: #{mlp_forward.1} parent=0 // pred_region
    _
  $region21: #{mlp_forward.1} parent=0 // pred_fallthru
    _
  // Predicated region
  $region22: #{mlp_forward.1} parent=0 // pred_check
    _
  $region23: #{mlp_forward.1} parent=0 // pred_check_branch
    %25 = sbr.rel (0) target = $region25
  $region24: #{mlp_forward.1} parent=0 // pred_region
    _
  $region25: #{mlp_forward.1} parent=0 // pred_fallthru
    _
  // Predicated region
  $region26: #{mlp_forward.1} parent=0 // pred_check
    _
  $region27: #{mlp_forward.1} parent=0 // pred_check_branch
    %27 = sbr.rel (0) target = $region29
  $region28: #{mlp_forward.1} parent=0 // pred_region
    _
  $region29: #{mlp_forward.1} parent=0 // pred_fallthru
    _
  // Predicated region
  $region30: #{mlp_forward.1} parent=0 // pred_check
    _
  $region31: #{mlp_forward.1} parent=0 // pred_check_branch
    %29 = sbr.rel (0) target = $region33
  $region32: #{mlp_forward.1} parent=0 // pred_region
    _
  $region33: #{mlp_forward.1} parent=0 // pred_fallthru
    _
  // Predicated region
  $region34: #{mlp_forward.1} parent=0 // pred_check
    _
  $region35: #{mlp_forward.1} parent=0 // pred_check_branch
    %31 = sbr.rel (0) target = $region37
  $region36: #{mlp_forward.1} parent=0 // pred_region
    _
  $region37: #{mlp_forward.1} parent=0 // pred_fallthru
    _
  %v33 = vld [vmem:[%s0] sm:$0xff]
  %v34 = vpack.c.bf16 %v33, %v33
  %v35 = vld [vmem:[%s1] sm:$0xf]
  %v36 = vld [vmem:[%s1 + $0x4] sm:$0xf]
  %v37 = vld [vmem:[%s1 + $0x8] sm:$0xf]
  %v38 = vld [vmem:[%s1 + $0xc] sm:$0xf]
  %v39 = vld [vmem:[%s2] sm:$0x1]
  %v40 = vunpack.c.l.bf16 %v39
  %v41 = vlaneseq
  %v42 = vshrl.u32 %v41, 7
  %v43 = vsub.s32 0, %v42
  %v44 = vrot.slane %v40, %v43
  %v49 = vunpack.c.l.b16 %v35
  %v50 = vunpack.c.l.b16 %v36
  %v51 = vunpack.c.l.b16 %v37
  %v52 = vunpack.c.l.b16 %v38
  %v53 = vpack.c.b16 %v50, %v49
  %v54 = vpack.c.b16 %v52, %v51
  %vm57 = vcmask 261120
  %v59 = vsel %vm57, %v34, 0
  %61 = vmatprep.subr.bf16.mxu0 0
  %62 = vmatpush1.bf16.msra.mxu0 %v53
  %63 = vmatprep.subr.bf16.mxu0 0
  %64 = vmatpush1.bf16.msra.mxu0 %v54
  %65 = vmatprep.subr.bf16.mxu0 0
  %66 = vmatpush1.bf16.msra.mxu0 0
  %67 = vmatprep.subr.bf16.mxu0 0
  %68 = vmatpush1.bf16.msra.mxu0 0
  %69 = vmatprep.subr.bf16.mxu0 0
  %70 = vmatpush1.bf16.msra.mxu0 0
  %71 = vmatprep.subr.bf16.mxu0 0
  %72 = vmatpush1.bf16.msra.mxu0 0
  %73 = vmatprep.subr.bf16.mxu0 0
  %74 = vmatpush1.bf16.msra.mxu0 0
  %75 = vmatprep.subr.bf16.mxu0 0
  %76 = vmatpush1.bf16.msra.mxu0 0
  %77 = vmatprep.subr.bf16.mxu0 0
  %78 = vmatpush1.bf16.msra.mxu0 0
  %79 = vmatprep.subr.bf16.mxu0 0
  %80 = vmatpush1.bf16.msra.mxu0 0
  %81 = vmatprep.subr.bf16.mxu0 0
  %82 = vmatpush1.bf16.msra.mxu0 0
  %83 = vmatprep.subr.bf16.mxu0 0
  %84 = vmatpush1.bf16.msra.mxu0 0
  %85 = vmatprep.subr.bf16.mxu0 0
  %86 = vmatpush1.bf16.msra.mxu0 0
  %87 = vmatprep.subr.bf16.mxu0 0
  %88 = vmatpush1.bf16.msra.mxu0 0
  %89 = vmatprep.subr.bf16.mxu0 0
  %90 = vmatpush1.bf16.msra.mxu0 0
  %91 = vmatprep.subr.bf16.mxu0 0
  %92 = vmatpush1.bf16.msra.mxu0 0
  %93 = vmatprep.mubr.bf16.mxu0 0
  %94 = vmatmul.mubr.bf16.gmra.mrb[0].mxu0 %v59
  %v95 = vpop.f32.mrb[0].mxu0
  %v96 = vadd.f32 %v44, %v95
  %v97 = vpop.f32.mrb[0].mxu0
  %v98 = vpop.f32.mrb[0].mxu0
  %v99 = vpop.f32.mrb[0].mxu0
  %100 = vdwg.mxu0
  %v101 = vmax.f32 %v96, 0.0
  %v102 = vpack.c.bf16 %v101, %v101
  %v103 = vld [vmem:[%s3] sm:$0xff]
  %v104 = vld [vmem:[%s3 + $0x8] sm:$0xff]
  %v105 = vld [vmem:[%s3 + $0x10] sm:$0xff]
  %v106 = vld [vmem:[%s3 + $0x18] sm:$0xff]
  %v107 = vld [vmem:[%s3 + $0x20] sm:$0xff]
  %v108 = vld [vmem:[%s3 + $0x28] sm:$0xff]
  %v109 = vld [vmem:[%s3 + $0x30] sm:$0xff]
  %v110 = vld [vmem:[%s3 + $0x38] sm:$0xff]
  %v111 = vld [vmem:[%s3 + $0x40] sm:$0xff]
  %v112 = vld [vmem:[%s3 + $0x48] sm:$0xff]
  %v113 = vld [vmem:[%s3 + $0x50] sm:$0xff]
  %v114 = vld [vmem:[%s3 + $0x58] sm:$0xff]
  %v115 = vld [vmem:[%s3 + $0x60] sm:$0xff]
  %v116 = vld [vmem:[%s3 + $0x68] sm:$0xff]
  %v117 = vld [vmem:[%s3 + $0x70] sm:$0xff]
  %v118 = vld [vmem:[%s3 + $0x78] sm:$0xff]
  %v119 = vld [vmem:[%s4] sm:$0x3]
  %v120 = vunpack.c.l.bf16 %v119
  %v122 = vlaneseq
  %v123 = vshrl.u32 %v122, 7
  %v124 = vsub.s32 0, %v123
  %v125 = vrot.slane %v120, %v124
  %v126 = vlaneseq
  %v127 = vshrl.u32 %v126, 7
  %v128 = vsub.s32 2, %v127
  %v129 = vrot.slane %v120, %v128
  %v132 = vlaneseq
  %v133 = vshrl.u32 %v132, 7
  %v134 = vsub.s32 0, %v133
  %v135 = vrot.slane %v125, %v134
  %v136 = vlaneseq
  %v137 = vshrl.u32 %v136, 7
  %v138 = vsub.s32 0, %v137
  %v139 = vrot.slane %v129, %v138
  %v156 = vunpack.c.l.b16 %v103
  %v157 = vunpack.c.h.b16 %v103
  %v158 = vunpack.c.l.b16 %v104
  %v159 = vunpack.c.h.b16 %v104
  %v160 = vunpack.c.l.b16 %v105
  %v161 = vunpack.c.h.b16 %v105
  %v162 = vunpack.c.l.b16 %v106
  %v163 = vunpack.c.h.b16 %v106
  %v164 = vunpack.c.l.b16 %v107
  %v165 = vunpack.c.h.b16 %v107
  %v166 = vunpack.c.l.b16 %v108
  %v167 = vunpack.c.h.b16 %v108
  %v168 = vunpack.c.l.b16 %v109
  %v169 = vunpack.c.h.b16 %v109
  %v170 = vunpack.c.l.b16 %v110
  %v171 = vunpack.c.h.b16 %v110
  %v172 = vunpack.c.l.b16 %v111
  %v173 = vunpack.c.h.b16 %v111
  %v174 = vunpack.c.l.b16 %v112
  %v175 = vunpack.c.h.b16 %v112
  %v176 = vunpack.c.l.b16 %v113
  %v177 = vunpack.c.h.b16 %v113
  %v178 = vunpack.c.l.b16 %v114
  %v179 = vunpack.c.h.b16 %v114
  %v180 = vunpack.c.l.b16 %v115
  %v181 = vunpack.c.h.b16 %v115
  %v182 = vunpack.c.l.b16 %v116
  %v183 = vunpack.c.h.b16 %v116
  %v184 = vunpack.c.l.b16 %v117
  %v185 = vunpack.c.h.b16 %v117
  %v186 = vunpack.c.l.b16 %v118
  %v187 = vunpack.c.h.b16 %v118
  %v188 = vpack.c.b16 %v158, %v156
  %v189 = vpack.c.b16 %v159, %v157
  %v190 = vpack.c.b16 %v162, %v160
  %v191 = vpack.c.b16 %v163, %v161
  %v192 = vpack.c.b16 %v166, %v164
  %v193 = vpack.c.b16 %v167, %v165
  %v194 = vpack.c.b16 %v170, %v168
  %v195 = vpack.c.b16 %v171, %v169
  %v196 = vpack.c.b16 %v174, %v172
  %v197 = vpack.c.b16 %v175, %v173
  %v198 = vpack.c.b16 %v178, %v176
  %v199 = vpack.c.b16 %v179, %v177
  %v200 = vpack.c.b16 %v182, %v180
  %v201 = vpack.c.b16 %v183, %v181
  %v202 = vpack.c.b16 %v186, %v184
  %v203 = vpack.c.b16 %v187, %v185
  %220 = vmatprep.subr.bf16.mxu0 %v189
  %221 = vmatpush1.bf16.msra.mxu0 %v188
  %222 = vmatprep.subr.bf16.mxu0 %v191
  %223 = vmatpush1.bf16.msra.mxu0 %v190
  %224 = vmatprep.subr.bf16.mxu0 %v193
  %225 = vmatpush1.bf16.msra.mxu0 %v192
  %226 = vmatprep.subr.bf16.mxu0 %v195
  %227 = vmatpush1.bf16.msra.mxu0 %v194
  %228 = vmatprep.subr.bf16.mxu0 %v197
  %229 = vmatpush1.bf16.msra.mxu0 %v196
  %230 = vmatprep.subr.bf16.mxu0 %v199
  %231 = vmatpush1.bf16.msra.mxu0 %v198
  %232 = vmatprep.subr.bf16.mxu0 %v201
  %233 = vmatpush1.bf16.msra.mxu0 %v200
  %234 = vmatprep.subr.bf16.mxu0 %v203
  %235 = vmatpush1.bf16.msra.mxu0 %v202
  %236 = vmatprep.subr.bf16.mxu0 0
  %237 = vmatpush1.bf16.msra.mxu0 0
  %238 = vmatprep.subr.bf16.mxu0 0
  %239 = vmatpush1.bf16.msra.mxu0 0
  %240 = vmatprep.subr.bf16.mxu0 0
  %241 = vmatpush1.bf16.msra.mxu0 0
  %242 = vmatprep.subr.bf16.mxu0 0
  %243 = vmatpush1.bf16.msra.mxu0 0
  %244 = vmatprep.subr.bf16.mxu0 0
  %245 = vmatpush1.bf16.msra.mxu0 0
  %246 = vmatprep.subr.bf16.mxu0 0
  %247 = vmatpush1.bf16.msra.mxu0 0
  %248 = vmatprep.subr.bf16.mxu0 0
  %249 = vmatpush1.bf16.msra.mxu0 0
  %250 = vmatprep.subr.bf16.mxu0 0
  %251 = vmatpush1.bf16.msra.mxu0 0
  %252 = vmatprep.mubr.bf16.mxu0 0
  %253 = vmatmul.mubr.bf16.gmra.mrb[0].mxu0 %v102
  %v254 = vpop.f32.mrb[0].mxu0
  %v255 = vadd.f32 %v135, %v254
  %v256 = vpop.f32.mrb[0].mxu0
  %v257 = vadd.f32 %v139, %v256
  %v258 = vpop.f32.mrb[0].mxu0
  %v259 = vpop.f32.mrb[0].mxu0
  %260 = vdwg.mxu0
  %v261 = vmax.f32 %v255, 0.0
  %v262 = vmax.f32 %v257, 0.0
  %v263 = vpack.c.bf16 %v261, %v261
  %v264 = vpack.c.bf16 %v262, %v262
  %v265 = vld [vmem:[%s5] sm:$0xff]
  %v266 = vld [vmem:[%s5 + $0x8] sm:$0xff]
  %v267 = vld [vmem:[%s5 + $0x10] sm:$0xff]
  %v268 = vld [vmem:[%s5 + $0x18] sm:$0xff]
  %v269 = vld [vmem:[%s5 + $0x20] sm:$0xff]
  %v270 = vld [vmem:[%s5 + $0x28] sm:$0xff]
  %v271 = vld [vmem:[%s5 + $0x30] sm:$0xff]
  %v272 = vld [vmem:[%s5 + $0x38] sm:$0xff]
  %v273 = vld [vmem:[%s5 + $0x40] sm:$0xff]
  %v274 = vld [vmem:[%s5 + $0x48] sm:$0xff]
  %v275 = vld [vmem:[%s5 + $0x50] sm:$0xff]
  %v276 = vld [vmem:[%s5 + $0x58] sm:$0xff]
  %v277 = vld [vmem:[%s5 + $0x60] sm:$0xff]
  %v278 = vld [vmem:[%s5 + $0x68] sm:$0xff]
  %v279 = vld [vmem:[%s5 + $0x70] sm:$0xff]
  %v280 = vld [vmem:[%s5 + $0x78] sm:$0xff]
  %v281 = vld [vmem:[%s5 + $0x80] sm:$0xff]
  %v282 = vld [vmem:[%s5 + $0x88] sm:$0xff]
  %v283 = vld [vmem:[%s5 + $0x90] sm:$0xff]
  %v284 = vld [vmem:[%s5 + $0x98] sm:$0xff]
  %v285 = vld [vmem:[%s5 + $0xa0] sm:$0xff]
  %v286 = vld [vmem:[%s5 + $0xa8] sm:$0xff]
  %v287 = vld [vmem:[%s5 + $0xb0] sm:$0xff]
  %v288 = vld [vmem:[%s5 + $0xb8] sm:$0xff]
  %v289 = vld [vmem:[%s5 + $0xc0] sm:$0xff]
  %v290 = vld [vmem:[%s5 + $0xc8] sm:$0xff]
  %v291 = vld [vmem:[%s5 + $0xd0] sm:$0xff]
  %v292 = vld [vmem:[%s5 + $0xd8] sm:$0xff]
  %v293 = vld [vmem:[%s5 + $0xe0] sm:$0xff]
  %v294 = vld [vmem:[%s5 + $0xe8] sm:$0xff]
  %v295 = vld [vmem:[%s5 + $0xf0] sm:$0xff]
  %v296 = vld [vmem:[%s5 + $0xf8] sm:$0xff]
  %v297 = vld [vmem:[%s5 + $0x100] sm:$0xff]
  %v298 = vld [vmem:[%s5 + $0x108] sm:$0xff]
  %v299 = vld [vmem:[%s5 + $0x110] sm:$0xff]
  %v300 = vld [vmem:[%s5 + $0x118] sm:$0xff]
  %v301 = vld [vmem:[%s5 + $0x120] sm:$0xff]
  %v302 = vld [vmem:[%s5 + $0x128] sm:$0xff]
  %v303 = vld [vmem:[%s5 + $0x130] sm:$0xff]
  %v304 = vld [vmem:[%s5 + $0x138] sm:$0xff]
  %v305 = vld [vmem:[%s5 + $0x140] sm:$0xff]
  %v306 = vld [vmem:[%s5 + $0x148] sm:$0xff]
  %v307 = vld [vmem:[%s5 + $0x150] sm:$0xff]
  %v308 = vld [vmem:[%s5 + $0x158] sm:$0xff]
  %v309 = vld [vmem:[%s5 + $0x160] sm:$0xff]
  %v310 = vld [vmem:[%s5 + $0x168] sm:$0xff]
  %v311 = vld [vmem:[%s5 + $0x170] sm:$0xff]
  %v312 = vld [vmem:[%s5 + $0x178] sm:$0xff]
  %v313 = vld [vmem:[%s5 + $0x180] sm:$0xff]
  %v314 = vld [vmem:[%s5 + $0x188] sm:$0xff]
  %v315 = vld [vmem:[%s5 + $0x190] sm:$0xff]
  %v316 = vld [vmem:[%s5 + $0x198] sm:$0xff]
  %v317 = vld [vmem:[%s5 + $0x1a0] sm:$0xff]
  %v318 = vld [vmem:[%s5 + $0x1a8] sm:$0xff]
  %v319 = vld [vmem:[%s5 + $0x1b0] sm:$0xff]
  %v320 = vld [vmem:[%s5 + $0x1b8] sm:$0xff]
  %v321 = vld [vmem:[%s5 + $0x1c0] sm:$0xff]
  %v322 = vld [vmem:[%s5 + $0x1c8] sm:$0xff]
  %v323 = vld [vmem:[%s5 + $0x1d0] sm:$0xff]
  %v324 = vld [vmem:[%s5 + $0x1d8] sm:$0xff]
  %v325 = vld [vmem:[%s5 + $0x1e0] sm:$0xff]
  %v326 = vld [vmem:[%s5 + $0x1e8] sm:$0xff]
  %v327 = vld [vmem:[%s5 + $0x1f0] sm:$0xff]
  %v328 = vld [vmem:[%s5 + $0x1f8] sm:$0xff]
  %v329 = vld [vmem:[%s6] sm:$0xf]
  %v330 = vunpack.c.l.bf16 %v329
  %v332 = vlaneseq
  %v333 = vshrl.u32 %v332, 7
  %v334 = vsub.s32 0, %v333
  %v335 = vrot.slane %v330, %v334
  %v336 = vlaneseq
  %v337 = vshrl.u32 %v336, 7
  %v338 = vsub.s32 2, %v337
  %v339 = vrot.slane %v330, %v338
  %v340 = vlaneseq
  %v341 = vshrl.u32 %v340, 7
  %v342 = vsub.s32 4, %v341
  %v343 = vrot.slane %v330, %v342
  %v344 = vlaneseq
  %v345 = vshrl.u32 %v344, 7
  %v346 = vsub.s32 6, %v345
  %v347 = vrot.slane %v330, %v346
  %v352 = vlaneseq
  %v353 = vshrl.u32 %v352, 7
  %v354 = vsub.s32 0, %v353
  %v355 = vrot.slane %v335, %v354
  %v356 = vlaneseq
  %v357 = vshrl.u32 %v356, 7
  %v358 = vsub.s32 0, %v357
  %v359 = vrot.slane %v339, %v358
  %v360 = vlaneseq
  %v361 = vshrl.u32 %v360, 7
  %v362 = vsub.s32 0, %v361
  %v363 = vrot.slane %v343, %v362
  %v364 = vlaneseq
  %v365 = vshrl.u32 %v364, 7
  %v366 = vsub.s32 0, %v365
  %v367 = vrot.slane %v347, %v366
  %v432 = vunpack.c.l.b16 %v265
  %v433 = vunpack.c.h.b16 %v265
  %v434 = vunpack.c.l.b16 %v266
  %v435 = vunpack.c.h.b16 %v266
  %v436 = vunpack.c.l.b16 %v267
  %v437 = vunpack.c.h.b16 %v267
  %v438 = vunpack.c.l.b16 %v268
  %v439 = vunpack.c.h.b16 %v268
  %v440 = vunpack.c.l.b16 %v269
  %v441 = vunpack.c.h.b16 %v269
  %v442 = vunpack.c.l.b16 %v270
  %v443 = vunpack.c.h.b16 %v270
  %v444 = vunpack.c.l.b16 %v271
  %v445 = vunpack.c.h.b16 %v271
  %v446 = vunpack.c.l.b16 %v272
  %v447 = vunpack.c.h.b16 %v272
  %v448 = vunpack.c.l.b16 %v273
  %v449 = vunpack.c.h.b16 %v273
  %v450 = vunpack.c.l.b16 %v274
  %v451 = vunpack.c.h.b16 %v274
  %v452 = vunpack.c.l.b16 %v275
  %v453 = vunpack.c.h.b16 %v275
  %v454 = vunpack.c.l.b16 %v276
  %v455 = vunpack.c.h.b16 %v276
  %v456 = vunpack.c.l.b16 %v277
  %v457 = vunpack.c.h.b16 %v277
  %v458 = vunpack.c.l.b16 %v278
  %v459 = vunpack.c.h.b16 %v278
  %v460 = vunpack.c.l.b16 %v279
  %v461 = vunpack.c.h.b16 %v279
  %v462 = vunpack.c.l.b16 %v280
  %v463 = vunpack.c.h.b16 %v280
  %v464 = vunpack.c.l.b16 %v281
  %v465 = vunpack.c.h.b16 %v281
  %v466 = vunpack.c.l.b16 %v282
  %v467 = vunpack.c.h.b16 %v282
  %v468 = vunpack.c.l.b16 %v283
  %v469 = vunpack.c.h.b16 %v283
  %v470 = vunpack.c.l.b16 %v284
  %v471 = vunpack.c.h.b16 %v284
  %v472 = vunpack.c.l.b16 %v285
  %v473 = vunpack.c.h.b16 %v285
  %v474 = vunpack.c.l.b16 %v286
  %v475 = vunpack.c.h.b16 %v286
  %v476 = vunpack.c.l.b16 %v287
  %v477 = vunpack.c.h.b16 %v287
  %v478 = vunpack.c.l.b16 %v288
  %v479 = vunpack.c.h.b16 %v288
  %v480 = vunpack.c.l.b16 %v289
  %v481 = vunpack.c.h.b16 %v289
  %v482 = vunpack.c.l.b16 %v290
  %v483 = vunpack.c.h.b16 %v290
  %v484 = vunpack.c.l.b16 %v291
  %v485 = vunpack.c.h.b16 %v291
  %v486 = vunpack.c.l.b16 %v292
  %v487 = vunpack.c.h.b16 %v292
  %v488 = vunpack.c.l.b16 %v293
  %v489 = vunpack.c.h.b16 %v293
  %v490 = vunpack.c.l.b16 %v294
  %v491 = vunpack.c.h.b16 %v294
  %v492 = vunpack.c.l.b16 %v295
  %v493 = vunpack.c.h.b16 %v295
  %v494 = vunpack.c.l.b16 %v296
  %v495 = vunpack.c.h.b16 %v296
  %v496 = vunpack.c.l.b16 %v297
  %v497 = vunpack.c.h.b16 %v297
  %v498 = vunpack.c.l.b16 %v298
  %v499 = vunpack.c.h.b16 %v298
  %v500 = vunpack.c.l.b16 %v299
  %v501 = vunpack.c.h.b16 %v299
  %v502 = vunpack.c.l.b16 %v300
  %v503 = vunpack.c.h.b16 %v300
  %v504 = vunpack.c.l.b16 %v301
  %v505 = vunpack.c.h.b16 %v301
  %v506 = vunpack.c.l.b16 %v302
  %v507 = vunpack.c.h.b16 %v302
  %v508 = vunpack.c.l.b16 %v303
  %v509 = vunpack.c.h.b16 %v303
  %v510 = vunpack.c.l.b16 %v304
  %v511 = vunpack.c.h.b16 %v304
  %v512 = vunpack.c.l.b16 %v305
  %v513 = vunpack.c.h.b16 %v305
  %v514 = vunpack.c.l.b16 %v306
  %v515 = vunpack.c.h.b16 %v306
  %v516 = vunpack.c.l.b16 %v307
  %v517 = vunpack.c.h.b16 %v307
  %v518 = vunpack.c.l.b16 %v308
  %v519 = vunpack.c.h.b16 %v308
  %v520 = vunpack.c.l.b16 %v309
  %v521 = vunpack.c.h.b16 %v309
  %v522 = vunpack.c.l.b16 %v310
  %v523 = vunpack.c.h.b16 %v310
  %v524 = vunpack.c.l.b16 %v311
  %v525 = vunpack.c.h.b16 %v311
  %v526 = vunpack.c.l.b16 %v312
  %v527 = vunpack.c.h.b16 %v312
  %v528 = vunpack.c.l.b16 %v313
  %v529 = vunpack.c.h.b16 %v313
  %v530 = vunpack.c.l.b16 %v314
  %v531 = vunpack.c.h.b16 %v314
  %v532 = vunpack.c.l.b16 %v315
  %v533 = vunpack.c.h.b16 %v315
  %v534 = vunpack.c.l.b16 %v316
  %v535 = vunpack.c.h.b16 %v316
  %v536 = vunpack.c.l.b16 %v317
  %v537 = vunpack.c.h.b16 %v317
  %v538 = vunpack.c.l.b16 %v318
  %v539 = vunpack.c.h.b16 %v318
  %v540 = vunpack.c.l.b16 %v319
  %v541 = vunpack.c.h.b16 %v319
  %v542 = vunpack.c.l.b16 %v320
  %v543 = vunpack.c.h.b16 %v320
  %v544 = vunpack.c.l.b16 %v321
  %v545 = vunpack.c.h.b16 %v321
  %v546 = vunpack.c.l.b16 %v322
  %v547 = vunpack.c.h.b16 %v322
  %v548 = vunpack.c.l.b16 %v323
  %v549 = vunpack.c.h.b16 %v323
  %v550 = vunpack.c.l.b16 %v324
  %v551 = vunpack.c.h.b16 %v324
  %v552 = vunpack.c.l.b16 %v325
  %v553 = vunpack.c.h.b16 %v325
  %v554 = vunpack.c.l.b16 %v326
  %v555 = vunpack.c.h.b16 %v326
  %v556 = vunpack.c.l.b16 %v327
  %v557 = vunpack.c.h.b16 %v327
  %v558 = vunpack.c.l.b16 %v328
  %v559 = vunpack.c.h.b16 %v328
  %v560 = vpack.c.b16 %v436, %v432
  %v561 = vpack.c.b16 %v437, %v433
  %v562 = vpack.c.b16 %v438, %v434
  %v563 = vpack.c.b16 %v439, %v435
  %v564 = vpack.c.b16 %v444, %v440
  %v565 = vpack.c.b16 %v445, %v441
  %v566 = vpack.c.b16 %v446, %v442
  %v567 = vpack.c.b16 %v447, %v443
  %v568 = vpack.c.b16 %v452, %v448
  %v569 = vpack.c.b16 %v453, %v449
  %v570 = vpack.c.b16 %v454, %v450
  %v571 = vpack.c.b16 %v455, %v451
  %v572 = vpack.c.b16 %v460, %v456
  %v573 = vpack.c.b16 %v461, %v457
  %v574 = vpack.c.b16 %v462, %v458
  %v575 = vpack.c.b16 %v463, %v459
  %v576 = vpack.c.b16 %v468, %v464
  %v577 = vpack.c.b16 %v469, %v465
  %v578 = vpack.c.b16 %v470, %v466
  %v579 = vpack.c.b16 %v471, %v467
  %v580 = vpack.c.b16 %v476, %v472
  %v581 = vpack.c.b16 %v477, %v473
  %v582 = vpack.c.b16 %v478, %v474
  %v583 = vpack.c.b16 %v479, %v475
  %v584 = vpack.c.b16 %v484, %v480
  %v585 = vpack.c.b16 %v485, %v481
  %v586 = vpack.c.b16 %v486, %v482
  %v587 = vpack.c.b16 %v487, %v483
  %v588 = vpack.c.b16 %v492, %v488
  %v589 = vpack.c.b16 %v493, %v489
  %v590 = vpack.c.b16 %v494, %v490
  %v591 = vpack.c.b16 %v495, %v491
  %v592 = vpack.c.b16 %v500, %v496
  %v593 = vpack.c.b16 %v501, %v497
  %v594 = vpack.c.b16 %v502, %v498
  %v595 = vpack.c.b16 %v503, %v499
  %v596 = vpack.c.b16 %v508, %v504
  %v597 = vpack.c.b16 %v509, %v505
  %v598 = vpack.c.b16 %v510, %v506
  %v599 = vpack.c.b16 %v511, %v507
  %v600 = vpack.c.b16 %v516, %v512
  %v601 = vpack.c.b16 %v517, %v513
  %v602 = vpack.c.b16 %v518, %v514
  %v603 = vpack.c.b16 %v519, %v515
  %v604 = vpack.c.b16 %v524, %v520
  %v605 = vpack.c.b16 %v525, %v521
  %v606 = vpack.c.b16 %v526, %v522
  %v607 = vpack.c.b16 %v527, %v523
  %v608 = vpack.c.b16 %v532, %v528
  %v609 = vpack.c.b16 %v533, %v529
  %v610 = vpack.c.b16 %v534, %v530
  %v611 = vpack.c.b16 %v535, %v531
  %v612 = vpack.c.b16 %v540, %v536
  %v613 = vpack.c.b16 %v541, %v537
  %v614 = vpack.c.b16 %v542, %v538
  %v615 = vpack.c.b16 %v543, %v539
  %v616 = vpack.c.b16 %v548, %v544
  %v617 = vpack.c.b16 %v549, %v545
  %v618 = vpack.c.b16 %v550, %v546
  %v619 = vpack.c.b16 %v551, %v547
  %v620 = vpack.c.b16 %v556, %v552
  %v621 = vpack.c.b16 %v557, %v553
  %v622 = vpack.c.b16 %v558, %v554
  %v623 = vpack.c.b16 %v559, %v555
  %688 = vmatprep.subr.bf16.mxu0 %v561
  %689 = vmatpush1.bf16.msra.mxu0 %v560
  %690 = vmatprep.subr.bf16.mxu0 %v565
  %691 = vmatpush1.bf16.msra.mxu0 %v564
  %692 = vmatprep.subr.bf16.mxu0 %v569
  %693 = vmatpush1.bf16.msra.mxu0 %v568
  %694 = vmatprep.subr.bf16.mxu0 %v573
  %695 = vmatpush1.bf16.msra.mxu0 %v572
  %696 = vmatprep.subr.bf16.mxu0 %v577
  %697 = vmatpush1.bf16.msra.mxu0 %v576
  %698 = vmatprep.subr.bf16.mxu0 %v581
  %699 = vmatpush1.bf16.msra.mxu0 %v580
  %700 = vmatprep.subr.bf16.mxu0 %v585
  %701 = vmatpush1.bf16.msra.mxu0 %v584
  %702 = vmatprep.subr.bf16.mxu0 %v589
  %703 = vmatpush1.bf16.msra.mxu0 %v588
  %704 = vmatprep.subr.bf16.mxu0 %v593
  %705 = vmatpush1.bf16.msra.mxu0 %v592
  %706 = vmatprep.subr.bf16.mxu0 %v597
  %707 = vmatpush1.bf16.msra.mxu0 %v596
  %708 = vmatprep.subr.bf16.mxu0 %v601
  %709 = vmatpush1.bf16.msra.mxu0 %v600
  %710 = vmatprep.subr.bf16.mxu0 %v605
  %711 = vmatpush1.bf16.msra.mxu0 %v604
  %712 = vmatprep.subr.bf16.mxu0 %v609
  %713 = vmatpush1.bf16.msra.mxu0 %v608
  %714 = vmatprep.subr.bf16.mxu0 %v613
  %715 = vmatpush1.bf16.msra.mxu0 %v612
  %716 = vmatprep.subr.bf16.mxu0 %v617
  %717 = vmatpush1.bf16.msra.mxu0 %v616
  %718 = vmatprep.subr.bf16.mxu0 %v621
  %719 = vmatpush1.bf16.msra.mxu0 %v620
  %720 = vmatprep.mubr.bf16.mxu0 %v264
  %721 = vmatmul.mubr.bf16.gmra.mrb[0].mxu0 %v263
  %v722 = vpop.f32.mrb[0].mxu0
  %v723 = vadd.f32 %v355, %v722
  %v724 = vpop.f32.mrb[0].mxu0
  %v725 = vadd.f32 %v359, %v724
  %v726 = vpop.f32.mrb[0].mxu0
  %v727 = vpop.f32.mrb[0].mxu0
  %728 = vdwg.mxu0
  %729 = vmatprep.subr.bf16.mxu0 %v563
  %730 = vmatpush1.bf16.msra.mxu0 %v562
  %731 = vmatprep.subr.bf16.mxu0 %v567
  %732 = vmatpush1.bf16.msra.mxu0 %v566
  %733 = vmatprep.subr.bf16.mxu0 %v571
  %734 = vmatpush1.bf16.msra.mxu0 %v570
  %735 = vmatprep.subr.bf16.mxu0 %v575
  %736 = vmatpush1.bf16.msra.mxu0 %v574
  %737 = vmatprep.subr.bf16.mxu0 %v579
  %738 = vmatpush1.bf16.msra.mxu0 %v578
  %739 = vmatprep.subr.bf16.mxu0 %v583
  %740 = vmatpush1.bf16.msra.mxu0 %v582
  %741 = vmatprep.subr.bf16.mxu0 %v587
  %742 = vmatpush1.bf16.msra.mxu0 %v586
  %743 = vmatprep.subr.bf16.mxu0 %v591
  %744 = vmatpush1.bf16.msra.mxu0 %v590
  %745 = vmatprep.subr.bf16.mxu0 %v595
  %746 = vmatpush1.bf16.msra.mxu0 %v594
  %747 = vmatprep.subr.bf16.mxu0 %v599
  %748 = vmatpush1.bf16.msra.mxu0 %v598
  %749 = vmatprep.subr.bf16.mxu0 %v603
  %750 = vmatpush1.bf16.msra.mxu0 %v602
  %751 = vmatprep.subr.bf16.mxu0 %v607
  %752 = vmatpush1.bf16.msra.mxu0 %v606
  %753 = vmatprep.subr.bf16.mxu0 %v611
  %754 = vmatpush1.bf16.msra.mxu0 %v610
  %755 = vmatprep.subr.bf16.mxu0 %v615
  %756 = vmatpush1.bf16.msra.mxu0 %v614
  %757 = vmatprep.subr.bf16.mxu0 %v619
  %758 = vmatpush1.bf16.msra.mxu0 %v618
  %759 = vmatprep.subr.bf16.mxu0 %v623
  %760 = vmatpush1.bf16.msra.mxu0 %v622
  %761 = vmatprep.mubr.bf16.mxu0 %v264
  %762 = vmatmul.mubr.bf16.gmra.mrb[0].mxu0 %v263
  %v763 = vpop.f32.mrb[0].mxu0
  %v764 = vadd.f32 %v363, %v763
  %v765 = vpop.f32.mrb[0].mxu0
  %v766 = vadd.f32 %v367, %v765
  %v767 = vpop.f32.mrb[0].mxu0
  %v768 = vpop.f32.mrb[0].mxu0
  %769 = vdwg.mxu0
  %v770 = vmax.f32 %v723, 0.0
  %v771 = vmax.f32 %v725, 0.0
  %v772 = vmax.f32 %v764, 0.0
  %v773 = vmax.f32 %v766, 0.0
  %v774 = vpack.c.bf16 %v770, %v770
  %v775 = vpack.c.bf16 %v771, %v771
  %v776 = vpack.c.bf16 %v772, %v772
  %v777 = vpack.c.bf16 %v773, %v773
  %v778 = vld [vmem:[%s7] sm:$0xf]
  %v779 = vld [vmem:[%s7 + $0x4] sm:$0xf]
  %v780 = vld [vmem:[%s7 + $0x8] sm:$0xf]
  %v781 = vld [vmem:[%s7 + $0xc] sm:$0xf]
  %v782 = vld [vmem:[%s7 + $0x10] sm:$0xf]
  %v783 = vld [vmem:[%s7 + $0x14] sm:$0xf]
  %v784 = vld [vmem:[%s7 + $0x18] sm:$0xf]
  %v785 = vld [vmem:[%s7 + $0x1c] sm:$0xf]
  %v786 = vld [vmem:[%s7 + $0x20] sm:$0xf]
  %v787 = vld [vmem:[%s7 + $0x24] sm:$0xf]
  %v788 = vld [vmem:[%s7 + $0x28] sm:$0xf]
  %v789 = vld [vmem:[%s7 + $0x2c] sm:$0xf]
  %v790 = vld [vmem:[%s7 + $0x30] sm:$0xf]
  %v791 = vld [vmem:[%s7 + $0x34] sm:$0xf]
  %v792 = vld [vmem:[%s7 + $0x38] sm:$0xf]
  %v793 = vld [vmem:[%s7 + $0x3c] sm:$0xf]
  %v794 = vld [vmem:[%s7 + $0x40] sm:$0xf]
  %v795 = vld [vmem:[%s7 + $0x44] sm:$0xf]
  %v796 = vld [vmem:[%s7 + $0x48] sm:$0xf]
  %v797 = vld [vmem:[%s7 + $0x4c] sm:$0xf]
  %v798 = vld [vmem:[%s7 + $0x50] sm:$0xf]
  %v799 = vld [vmem:[%s7 + $0x54] sm:$0xf]
  %v800 = vld [vmem:[%s7 + $0x58] sm:$0xf]
  %v801 = vld [vmem:[%s7 + $0x5c] sm:$0xf]
  %v802 = vld [vmem:[%s7 + $0x60] sm:$0xf]
  %v803 = vld [vmem:[%s7 + $0x64] sm:$0xf]
  %v804 = vld [vmem:[%s7 + $0x68] sm:$0xf]
  %v805 = vld [vmem:[%s7 + $0x6c] sm:$0xf]
  %v806 = vld [vmem:[%s7 + $0x70] sm:$0xf]
  %v807 = vld [vmem:[%s7 + $0x74] sm:$0xf]
  %v808 = vld [vmem:[%s7 + $0x78] sm:$0xf]
  %v809 = vld [vmem:[%s7 + $0x7c] sm:$0xf]
  %v810 = vld [vmem:[%s7 + $0x80] sm:$0xf]
  %v811 = vld [vmem:[%s7 + $0x84] sm:$0xf]
  %v812 = vld [vmem:[%s7 + $0x88] sm:$0xf]
  %v813 = vld [vmem:[%s7 + $0x8c] sm:$0xf]
  %v814 = vld [vmem:[%s7 + $0x90] sm:$0xf]
  %v815 = vld [vmem:[%s7 + $0x94] sm:$0xf]
  %v816 = vld [vmem:[%s7 + $0x98] sm:$0xf]
  %v817 = vld [vmem:[%s7 + $0x9c] sm:$0xf]
  %v818 = vld [vmem:[%s7 + $0xa0] sm:$0xf]
  %v819 = vld [vmem:[%s7 + $0xa4] sm:$0xf]
  %v820 = vld [vmem:[%s7 + $0xa8] sm:$0xf]
  %v821 = vld [vmem:[%s7 + $0xac] sm:$0xf]
  %v822 = vld [vmem:[%s7 + $0xb0] sm:$0xf]
  %v823 = vld [vmem:[%s7 + $0xb4] sm:$0xf]
  %v824 = vld [vmem:[%s7 + $0xb8] sm:$0xf]
  %v825 = vld [vmem:[%s7 + $0xbc] sm:$0xf]
  %v826 = vld [vmem:[%s7 + $0xc0] sm:$0xf]
  %v827 = vld [vmem:[%s7 + $0xc4] sm:$0xf]
  %v828 = vld [vmem:[%s7 + $0xc8] sm:$0xf]
  %v829 = vld [vmem:[%s7 + $0xcc] sm:$0xf]
  %v830 = vld [vmem:[%s7 + $0xd0] sm:$0xf]
  %v831 = vld [vmem:[%s7 + $0xd4] sm:$0xf]
  %v832 = vld [vmem:[%s7 + $0xd8] sm:$0xf]
  %v833 = vld [vmem:[%s7 + $0xdc] sm:$0xf]
  %v834 = vld [vmem:[%s7 + $0xe0] sm:$0xf]
  %v835 = vld [vmem:[%s7 + $0xe4] sm:$0xf]
  %v836 = vld [vmem:[%s7 + $0xe8] sm:$0xf]
  %v837 = vld [vmem:[%s7 + $0xec] sm:$0xf]
  %v838 = vld [vmem:[%s7 + $0xf0] sm:$0xf]
  %v839 = vld [vmem:[%s7 + $0xf4] sm:$0xf]
  %v840 = vld [vmem:[%s7 + $0xf8] sm:$0xf]
  %v841 = vld [vmem:[%s7 + $0xfc] sm:$0xf]
  %v842 = vld [vmem:[%s8] sm:$0x1]
  %v843 = vunpack.c.l.bf16 %v842
  %v844 = vlaneseq
  %v845 = vshrl.u32 %v844, 7
  %v846 = vsub.s32 0, %v845
  %v847 = vrot.slane %v843, %v846
  %v912 = vunpack.c.l.b16 %v778
  %v913 = vunpack.c.l.b16 %v779
  %v914 = vunpack.c.l.b16 %v780
  %v915 = vunpack.c.l.b16 %v781
  %v916 = vunpack.c.l.b16 %v782
  %v917 = vunpack.c.l.b16 %v783
  %v918 = vunpack.c.l.b16 %v784
  %v919 = vunpack.c.l.b16 %v785
  %v920 = vunpack.c.l.b16 %v786
  %v921 = vunpack.c.l.b16 %v787
  %v922 = vunpack.c.l.b16 %v788
  %v923 = vunpack.c.l.b16 %v789
  %v924 = vunpack.c.l.b16 %v790
  %v925 = vunpack.c.l.b16 %v791
  %v926 = vunpack.c.l.b16 %v792
  %v927 = vunpack.c.l.b16 %v793
  %v928 = vunpack.c.l.b16 %v794
  %v929 = vunpack.c.l.b16 %v795
  %v930 = vunpack.c.l.b16 %v796
  %v931 = vunpack.c.l.b16 %v797
  %v932 = vunpack.c.l.b16 %v798
  %v933 = vunpack.c.l.b16 %v799
  %v934 = vunpack.c.l.b16 %v800
  %v935 = vunpack.c.l.b16 %v801
  %v936 = vunpack.c.l.b16 %v802
  %v937 = vunpack.c.l.b16 %v803
  %v938 = vunpack.c.l.b16 %v804
  %v939 = vunpack.c.l.b16 %v805
  %v940 = vunpack.c.l.b16 %v806
  %v941 = vunpack.c.l.b16 %v807
  %v942 = vunpack.c.l.b16 %v808
  %v943 = vunpack.c.l.b16 %v809
  %v944 = vunpack.c.l.b16 %v810
  %v945 = vunpack.c.l.b16 %v811
  %v946 = vunpack.c.l.b16 %v812
  %v947 = vunpack.c.l.b16 %v813
  %v948 = vunpack.c.l.b16 %v814
  %v949 = vunpack.c.l.b16 %v815
  %v950 = vunpack.c.l.b16 %v816
  %v951 = vunpack.c.l.b16 %v817
  %v952 = vunpack.c.l.b16 %v818
  %v953 = vunpack.c.l.b16 %v819
  %v954 = vunpack.c.l.b16 %v820
  %v955 = vunpack.c.l.b16 %v821
  %v956 = vunpack.c.l.b16 %v822
  %v957 = vunpack.c.l.b16 %v823
  %v958 = vunpack.c.l.b16 %v824
  %v959 = vunpack.c.l.b16 %v825
  %v960 = vunpack.c.l.b16 %v826
  %v961 = vunpack.c.l.b16 %v827
  %v962 = vunpack.c.l.b16 %v828
  %v963 = vunpack.c.l.b16 %v829
  %v964 = vunpack.c.l.b16 %v830
  %v965 = vunpack.c.l.b16 %v831
  %v966 = vunpack.c.l.b16 %v832
  %v967 = vunpack.c.l.b16 %v833
  %v968 = vunpack.c.l.b16 %v834
  %v969 = vunpack.c.l.b16 %v835
  %v970 = vunpack.c.l.b16 %v836
  %v971 = vunpack.c.l.b16 %v837
  %v972 = vunpack.c.l.b16 %v838
  %v973 = vunpack.c.l.b16 %v839
  %v974 = vunpack.c.l.b16 %v840
  %v975 = vunpack.c.l.b16 %v841
  %v976 = vpack.c.b16 %v913, %v912
  %v977 = vpack.c.b16 %v915, %v914
  %v978 = vpack.c.b16 %v917, %v916
  %v979 = vpack.c.b16 %v919, %v918
  %v980 = vpack.c.b16 %v921, %v920
  %v981 = vpack.c.b16 %v923, %v922
  %v982 = vpack.c.b16 %v925, %v924
  %v983 = vpack.c.b16 %v927, %v926
  %v984 = vpack.c.b16 %v929, %v928
  %v985 = vpack.c.b16 %v931, %v930
  %v986 = vpack.c.b16 %v933, %v932
  %v987 = vpack.c.b16 %v935, %v934
  %v988 = vpack.c.b16 %v937, %v936
  %v989 = vpack.c.b16 %v939, %v938
  %v990 = vpack.c.b16 %v941, %v940
  %v991 = vpack.c.b16 %v943, %v942
  %v992 = vpack.c.b16 %v945, %v944
  %v993 = vpack.c.b16 %v947, %v946
  %v994 = vpack.c.b16 %v949, %v948
  %v995 = vpack.c.b16 %v951, %v950
  %v996 = vpack.c.b16 %v953, %v952
  %v997 = vpack.c.b16 %v955, %v954
  %v998 = vpack.c.b16 %v957, %v956
  %v999 = vpack.c.b16 %v959, %v958
  %v1000 = vpack.c.b16 %v961, %v960
  %v1001 = vpack.c.b16 %v963, %v962
  %v1002 = vpack.c.b16 %v965, %v964
  %v1003 = vpack.c.b16 %v967, %v966
  %v1004 = vpack.c.b16 %v969, %v968
  %v1005 = vpack.c.b16 %v971, %v970
  %v1006 = vpack.c.b16 %v973, %v972
  %v1007 = vpack.c.b16 %v975, %v974
  %1040 = vmatprep.subr.bf16.mxu0 0
  %1041 = vmatpush1.bf16.msra.mxu0 %v976
  %1042 = vmatprep.subr.bf16.mxu0 0
  %1043 = vmatpush1.bf16.msra.mxu0 %v977
  %1044 = vmatprep.subr.bf16.mxu0 0
  %1045 = vmatpush1.bf16.msra.mxu0 %v978
  %1046 = vmatprep.subr.bf16.mxu0 0
  %1047 = vmatpush1.bf16.msra.mxu0 %v979
  %1048 = vmatprep.subr.bf16.mxu0 0
  %1049 = vmatpush1.bf16.msra.mxu0 %v980
  %1050 = vmatprep.subr.bf16.mxu0 0
  %1051 = vmatpush1.bf16.msra.mxu0 %v981
  %1052 = vmatprep.subr.bf16.mxu0 0
  %1053 = vmatpush1.bf16.msra.mxu0 %v982
  %1054 = vmatprep.subr.bf16.mxu0 0
  %1055 = vmatpush1.bf16.msra.mxu0 %v983
  %1056 = vmatprep.subr.bf16.mxu0 0
  %1057 = vmatpush1.bf16.msra.mxu0 %v984
  %1058 = vmatprep.subr.bf16.mxu0 0
  %1059 = vmatpush1.bf16.msra.mxu0 %v985
  %1060 = vmatprep.subr.bf16.mxu0 0
  %1061 = vmatpush1.bf16.msra.mxu0 %v986
  %1062 = vmatprep.subr.bf16.mxu0 0
  %1063 = vmatpush1.bf16.msra.mxu0 %v987
  %1064 = vmatprep.subr.bf16.mxu0 0
  %1065 = vmatpush1.bf16.msra.mxu0 %v988
  %1066 = vmatprep.subr.bf16.mxu0 0
  %1067 = vmatpush1.bf16.msra.mxu0 %v989
  %1068 = vmatprep.subr.bf16.mxu0 0
  %1069 = vmatpush1.bf16.msra.mxu0 %v990
  %1070 = vmatprep.subr.bf16.mxu0 0
  %1071 = vmatpush1.bf16.msra.mxu0 %v991
  %1072 = vmatprep.mubr.bf16.mxu0 %v775
  %1073 = vmatmul.mubr.bf16.gmra.mrb[0].mxu0 %v774
  %v1074 = vpop.f32.mrb[0].mxu0
  %v1075 = vadd.f32 %v847, %v1074
  %v1076 = vpop.f32.mrb[0].mxu0
  %v1077 = vpop.f32.mrb[0].mxu0
  %v1078 = vpop.f32.mrb[0].mxu0
  %1079 = vdwg.mxu0
  %1080 = vmatprep.subr.bf16.mxu0 0
  %1081 = vmatpush1.bf16.msra.mxu0 %v992
  %1082 = vmatprep.subr.bf16.mxu0 0
  %1083 = vmatpush1.bf16.msra.mxu0 %v993
  %1084 = vmatprep.subr.bf16.mxu0 0
  %1085 = vmatpush1.bf16.msra.mxu0 %v994
  %1086 = vmatprep.subr.bf16.mxu0 0
  %1087 = vmatpush1.bf16.msra.mxu0 %v995
  %1088 = vmatprep.subr.bf16.mxu0 0
  %1089 = vmatpush1.bf16.msra.mxu0 %v996
  %1090 = vmatprep.subr.bf16.mxu0 0
  %1091 = vmatpush1.bf16.msra.mxu0 %v997
  %1092 = vmatprep.subr.bf16.mxu0 0
  %1093 = vmatpush1.bf16.msra.mxu0 %v998
  %1094 = vmatprep.subr.bf16.mxu0 0
  %1095 = vmatpush1.bf16.msra.mxu0 %v999
  %1096 = vmatprep.subr.bf16.mxu0 0
  %1097 = vmatpush1.bf16.msra.mxu0 %v1000
  %1098 = vmatprep.subr.bf16.mxu0 0
  %1099 = vmatpush1.bf16.msra.mxu0 %v1001
  %1100 = vmatprep.subr.bf16.mxu0 0
  %1101 = vmatpush1.bf16.msra.mxu0 %v1002
  %1102 = vmatprep.subr.bf16.mxu0 0
  %1103 = vmatpush1.bf16.msra.mxu0 %v1003
  %1104 = vmatprep.subr.bf16.mxu0 0
  %1105 = vmatpush1.bf16.msra.mxu0 %v1004
  %1106 = vmatprep.subr.bf16.mxu0 0
  %1107 = vmatpush1.bf16.msra.mxu0 %v1005
  %1108 = vmatprep.subr.bf16.mxu0 0
  %1109 = vmatpush1.bf16.msra.mxu0 %v1006
  %1110 = vmatprep.subr.bf16.mxu0 0
  %1111 = vmatpush1.bf16.msra.mxu0 %v1007
  %1112 = vmatprep.mubr.bf16.mxu0 %v777
  %1113 = vmatmul.mubr.bf16.gmra.mrb[0].mxu0 %v776
  %v1114 = vpop.f32.mrb[0].mxu0
  %v1115 = vadd.f32 %v1075, %v1114
  %v1116 = vpop.f32.mrb[0].mxu0
  %v1117 = vpop.f32.mrb[0].mxu0
  %v1118 = vpop.f32.mrb[0].mxu0
  %1119 = vdwg.mxu0
  %1121 = vrot.lane.b32.xlu0 %v1115, 127
  %v1122 = vpop.permute.xlu0 %1121
  %v1124 = vsub.f32 %v1115, %v1122
  %v1125 = vmul.f32 %v1124, 1.442695
  %v1126 = vpow.pop %v1125
  %v1127 = vadd.f32 %v1126, 1.0
  %v1128 = vrcp.pop %v1127
  %v1129 = vsub.f32 1.0, %v1128
  %vm1130 = vcmask 15360
  %1131 = vst.msk [vmem:[%s9] sm:$0xff] %vm1130, %v1115
  %1133 = vrot.lane.b32.xlu0 %v1129, 2
  %v1134 = vpop.permute.xlu0 %1133
  %vm1136 = vcmask 23568
  %1137 = vst.msk [vmem:[%s9] sm:$0xff] %vm1136, %v1134
  %1139 = vrot.lane.b32.xlu0 %v1128, 3
  %v1140 = vpop.permute.xlu0 %1139
  %vm1142 = vcmask 31768
  %1143 = vst.msk [vmem:[%s9] sm:$0xff] %vm1142, %v1140
  // Predicated region
  $region38: #{mlp_forward.1} parent=0 // pred_check
    _
  $region39: #{mlp_forward.1} parent=0 // pred_check_branch
    %1145 = sbr.rel (0) target = $region41
  $region40: #{mlp_forward.1} parent=0 // pred_region
    _
  $region41: #{mlp_forward.1} parent=0 // pred_fallthru
    _
  // Predicated region
  $region42: #{mlp_forward.1} parent=0 // pred_check
    _
  $region43: #{mlp_forward.1} parent=0 // pred_check_branch
    %1147 = sbr.rel (0) target = $region45
  $region44: #{mlp_forward.1} parent=0 // pred_region
    _
  $region45: #{mlp_forward.1} parent=0 // pred_fallthru
    _

</llo_original>
